<compile_context>
chip_gen: v7x
topology: tpu7x:2x2x1
jax: 0.10.0
libtpu: 0.0.40
codegen_flags: <defaults>
</compile_context>

<pallas_src>
import functools

import jax
import jax.numpy as jnp
from jax.experimental import pallas as pl
from jax.experimental.pallas import tpu as pltpu


# ---------------------------------------------------------------------------
# Kernel
# ---------------------------------------------------------------------------
def _linear_kernel(x_ref, w_ref, b_ref, o_ref):
    # x_ref: (bm, K)  VMEM
    # w_ref: (K, N)   VMEM  (pre-transposed nn.Linear weight)
    # b_ref: (1, N)   VMEM
    # o_ref: (bm, N)  VMEM
    acc = jnp.dot(x_ref[...], w_ref[...], preferred_element_type=jnp.float32)
    o_ref[...] = (acc + b_ref[...]).astype(o_ref.dtype)


# ---------------------------------------------------------------------------
# One-time parameter re-layout (done at "module init", never per call)
# ---------------------------------------------------------------------------
def prepare_linear_params(weight, bias):
    """nn.Linear params -> kernel layout: W (out,in) -> (in,out), b -> (1,out)."""
    w_kn = jnp.asarray(jnp.transpose(weight))      # materialized once
    b_row = jnp.asarray(bias).reshape(1, -1)
    return w_kn, b_row


# ---------------------------------------------------------------------------
# Forward wrappers
# ---------------------------------------------------------------------------
_GRID_BATCH_THRESHOLD = 1024   # below this, a single whole-array invocation wins
_BATCH_BLOCK = 512             # >=512-row tiles reach ~85% of HBM roofline


@jax.jit
def _linear_forward_whole(x, w_kn, b_row):
    """Small-batch path: no grid, whole arrays resident in VMEM, zero wrapper HLOs."""
    B, K = x.shape
    N = w_kn.shape[1]
    return pl.pallas_call(
        _linear_kernel,
        out_shape=jax.ShapeDtypeStruct((B, N), x.dtype),
        in_specs=[
            pl.BlockSpec(memory_space=pltpu.MemorySpace.VMEM),
            pl.BlockSpec(memory_space=pltpu.MemorySpace.VMEM),
            pl.BlockSpec(memory_space=pltpu.MemorySpace.VMEM),
        ],
        out_specs=pl.BlockSpec(memory_space=pltpu.MemorySpace.VMEM),
        cost_estimate=pl.CostEstimate(
            flops=2 * B * K * N,
            transcendentals=0,
            bytes_accessed=4 * (B * K + K * N + N + B * N),
        ),
    )(x, w_kn, b_row)


@functools.partial(jax.jit, static_argnames=("block_rows",))
def _linear_forward_grid(x, w_kn, b_row, block_rows):
    """Large-batch path: 1-D batch grid, W/b resident, double-buffered x/y streams."""
    B, K = x.shape
    N = w_kn.shape[1]
    grid = (pl.cdiv(B, block_rows),)
    return pl.pallas_call(
        _linear_kernel,
        out_shape=jax.ShapeDtypeStruct((B, N), x.dtype),
        grid=grid,
        in_specs=[
            pl.BlockSpec((block_rows, K), lambda i: (i, 0)),   # stream x over batch
            pl.BlockSpec((K, N), lambda i: (0, 0)),            # W resident
            pl.BlockSpec((1, N), lambda i: (0, 0)),            # b resident
        ],
        out_specs=pl.BlockSpec((block_rows, N), lambda i: (i, 0)),
        compiler_params=pltpu.CompilerParams(
            dimension_semantics=("parallel",),   # shard batch grid across v7x TCs
        ),
        cost_estimate=pl.CostEstimate(
            flops=2 * B * K * N,
            transcendentals=0,
            bytes_accessed=4 * (B * K + K * N + N + B * N),
        ),
    )(x, w_kn, b_row)


def linear_forward(x, w_kn, b_row):
    """y = x @ W.T + b (params already re-laid-out by prepare_linear_params)."""
    if x.shape[0] >= _GRID_BATCH_THRESHOLD:
        return _linear_forward_grid(x, w_kn, b_row, _BATCH_BLOCK)
    return _linear_forward_whole(x, w_kn, b_row)
    # TODO(synk): at genuinely large feature sizes, cast x/W to bf16 (f32 accumulate)
    # to fill the 256-wide MXU on v6e/v7x; irrelevant at in=32/out=8.


# ---------------------------------------------------------------------------
# Demo / self-check
# ---------------------------------------------------------------------------
if __name__ == "__main__":
    input_size = 32
    output_size = 8
    batch = 4

    key = jax.random.PRNGKey(0)
    kx, kw, kb, kx2 = jax.random.split(key, 4)

    # PyTorch-like default init: U(-1/sqrt(in), 1/sqrt(in))
    bound = 1.0 / jnp.sqrt(jnp.float32(input_size))
    weight = jax.random.uniform(kw, (output_size, input_size),
                                minval=-bound, maxval=bound, dtype=jnp.float32)
    bias = jax.random.uniform(kb, (output_size,),
                              minval=-bound, maxval=bound, dtype=jnp.float32)
    x = jax.random.normal(kx, (batch, input_size), dtype=jnp.float32)

    # One-time parameter re-layout (module init), NOT part of the per-call path.
    w_kn, b_row = prepare_linear_params(weight, bias)

    # Small-batch (no-grid) path.
    y = linear_forward(x, w_kn, b_row)
    jax.block_until_ready(y)
    y_ref = x @ weight.T + bias
    assert y.shape == (batch, output_size)
    assert jnp.allclose(y, y_ref, atol=1e-5, rtol=1e-5)

    # Large-batch (gridded, parallel-over-batch) path.
    x_big = jax.random.normal(kx2, (2048, input_size), dtype=jnp.float32)
    y_big = linear_forward(x_big, w_kn, b_row)
    jax.block_until_ready(y_big)
    y_big_ref = x_big @ weight.T + bias
    assert y_big.shape == (2048, output_size)
    assert jnp.allclose(y_big, y_big_ref, atol=1e-5, rtol=1e-5)

    print("KERNEL_OK")
</pallas_src>

<mosaic_0001>
module attributes {stable_mosaic.version = 11 : i64} {
  func.func @_linear_kernel(%arg0: memref<4x32xf32, #tpu.memory_space<vmem>>, %arg1: memref<32x8xf32, #tpu.memory_space<vmem>>, %arg2: memref<1x8xf32, #tpu.memory_space<vmem>>, %arg3: memref<4x8xf32, #tpu.memory_space<vmem>>) attributes {dimension_semantics = [], scalar_prefetch = 0 : i64, scratch_operands = 0 : i64, tpu.core_type = #tpu.core_type<tc>} {
    %c0 = arith.constant 0 : index
    %c0_0 = arith.constant 0 : index
    %0 = vector.load %arg0[%c0, %c0_0] : memref<4x32xf32, #tpu.memory_space<vmem>>, vector<4x32xf32>
    %c0_1 = arith.constant 0 : index
    %c0_2 = arith.constant 0 : index
    %1 = vector.load %arg1[%c0_1, %c0_2] : memref<32x8xf32, #tpu.memory_space<vmem>>, vector<32x8xf32>
    %cst = arith.constant dense<0.000000e+00> : vector<4x8xf32>
    %2 = tpu.matmul %0, %1, %cst {dimension_numbers = #tpu.dot_dimension_numbers<[1], [0], [0], [1], [0, 0, 1, 1], [], []>} : vector<4x32xf32>, vector<32x8xf32>, vector<4x8xf32> -> vector<4x8xf32>
    %c0_3 = arith.constant 0 : index
    %c0_4 = arith.constant 0 : index
    %3 = vector.load %arg2[%c0_3, %c0_4] : memref<1x8xf32, #tpu.memory_space<vmem>>, vector<1x8xf32>
    %4 = vector.broadcast %3 : vector<1x8xf32> to vector<4x8xf32>
    %5 = arith.addf %2, %4 : vector<4x8xf32>
    %c0_5 = arith.constant 0 : index
    %c0_6 = arith.constant 0 : index
    %6 = vector.load %arg3[%c0_5, %c0_6] : memref<4x8xf32, #tpu.memory_space<vmem>>, vector<4x8xf32>
    tpu.vector_store %arg3[%c0_5, %c0_6], %5 {strides = array<i32>} : memref<4x8xf32, #tpu.memory_space<vmem>>, vector<4x8xf32>,
    return
  }
}

</mosaic_0001>

<llo_original>
// kernel: _linear_forward_whole.1
$region0: #{_linear_forward_whole.1}
  #allocation0 [shape = 'u32[]', space=smem, size = 0x4, offset = 0x4, fixed_abs, tag = 'smem constant byte address 0x4 - core index']
  #allocation1 [shape = 'u32[144,128]{1,0:T(1,128)}', space=vmem, size = 0x12000, scoped, tag = 'internal scratch']
  %s0 = inlined_call_operand.vmem [shape: f32[4,32], index: 0, kind: input, shape index: {}]
  %s1 = inlined_call_operand.vmem [shape: f32[32,8], index: 1, kind: input, shape index: {}]
  %s2 = inlined_call_operand.vmem [shape: f32[1,8], index: 2, kind: input, shape index: {}]
  %s3 = inlined_call_operand.hbm [shape: f32[4,8], index: 3, kind: output, shape index: {}]
  %s4 = sld [smem:[#allocation0]]
  $region22: #{_linear_forward_whole.1} parent=0
    _
  %s6 = ssub.s32 1, %s4
  %s7 = scalar_select 0, %s6, %s4
  $region1: #{_linear_forward_whole.1} parent=0
    #allocation2 [shape = 'u8[2048]{0}', space=vmem, size = 0x800, scoped, tag = 'output window, operand 0, single buffered']
    #allocation3 [shape = 's32[1]{0}', space=sflag, size = 0x4, scoped, tag = 'scoped memory for _linear_forward_whole.1']
    %8 = vsyncpa [#allocation3], 0
    // Predicated region
    $region2: #{_linear_forward_whole.1} parent=1 // pred_check
      _
    $region3: #{_linear_forward_whole.1} parent=1 // pred_check_branch
      %10 = sbr.rel (0) target = $region5
    $region4: #{_linear_forward_whole.1} parent=1 // pred_region
      _
    $region5: #{_linear_forward_whole.1} parent=1 // pred_fallthru
      _
    // Predicated region
    $region6: #{_linear_forward_whole.1} parent=1 // pred_check
      _
    $region7: #{_linear_forward_whole.1} parent=1 // pred_check_branch
      %12 = sbr.rel (0) target = $region9
    $region8: #{_linear_forward_whole.1} parent=1 // pred_region
      _
    $region9: #{_linear_forward_whole.1} parent=1 // pred_fallthru
      _
    // Predicated region
    $region10: #{_linear_forward_whole.1} parent=1 // pred_check
      _
    $region11: #{_linear_forward_whole.1} parent=1 // pred_check_branch
      %14 = sbr.rel (0) target = $region13
    $region12: #{_linear_forward_whole.1} parent=1 // pred_region
      _
    $region13: #{_linear_forward_whole.1} parent=1 // pred_fallthru
      _
    %v15 = vld [vmem:[%s0] sm:$0xf]
    %v16 = vld [vmem:[%s1] sm:$0xff]
    %v17 = vld [vmem:[%s1 + $0x8] sm:$0xff]
    %v18 = vld [vmem:[%s1 + $0x10] sm:$0xff]
    %v19 = vld [vmem:[%s1 + $0x18] sm:$0xff]
    %v20 = vld [vmem:[%s2] sm:$0x1]
    %v22 = vlaneseq
    %v23 = vshrl.u32 %v22, 7
    %v24 = vsub.s32 0, %v23
    %v25 = vrot.slane %v20, %v24
    %vm27 = vcmask 261120
    %v29 = vsel %vm27, %v15, 0
    %31 = vmatprep.subr.mxu0 0.0
    %32 = vmatpush1.msra.mxu0 %v16
    %33 = vmatprep.subr.mxu0 0.0
    %34 = vmatpush1.msra.mxu0 %v17
    %35 = vmatprep.subr.mxu0 0.0
    %36 = vmatpush1.msra.mxu0 %v18
    %37 = vmatprep.subr.mxu0 0.0
    %38 = vmatpush1.msra.mxu0 %v19
    %39 = vmatprep.subr.mxu0 0.0
    %40 = vmatpush1.msra.mxu0 0.0
    %41 = vmatprep.subr.mxu0 0.0
    %42 = vmatpush1.msra.mxu0 0.0
    %43 = vmatprep.subr.mxu0 0.0
    %44 = vmatpush1.msra.mxu0 0.0
    %45 = vmatprep.subr.mxu0 0.0
    %46 = vmatpush1.msra.mxu0 0.0
    %47 = vmatprep.subr.mxu0 0.0
    %48 = vmatpush1.msra.mxu0 0.0
    %49 = vmatprep.subr.mxu0 0.0
    %50 = vmatpush1.msra.mxu0 0.0
    %51 = vmatprep.subr.mxu0 0.0
    %52 = vmatpush1.msra.mxu0 0.0
    %53 = vmatprep.subr.mxu0 0.0
    %54 = vmatpush1.msra.mxu0 0.0
    %55 = vmatprep.subr.mxu0 0.0
    %56 = vmatpush1.msra.mxu0 0.0
    %57 = vmatprep.subr.mxu0 0.0
    %58 = vmatpush1.msra.mxu0 0.0
    %59 = vmatprep.subr.mxu0 0.0
    %60 = vmatpush1.msra.mxu0 0.0
    %61 = vmatprep.subr.mxu0 0.0
    %62 = vmatpush1.msra.mxu0 0.0
    %63 = vmatprep.subr.mxu0 0.0
    %64 = vmatpush1.msra.mxu0 0.0
    %65 = vmatprep.subr.mxu0 0.0
    %66 = vmatpush1.msra.mxu0 0.0
    %67 = vmatprep.subr.mxu0 0.0
    %68 = vmatpush1.msra.mxu0 0.0
    %69 = vmatprep.subr.mxu0 0.0
    %70 = vmatpush1.msra.mxu0 0.0
    %71 = vmatprep.subr.mxu0 0.0
    %72 = vmatpush1.msra.mxu0 0.0
    %73 = vmatprep.subr.mxu0 0.0
    %74 = vmatpush1.msra.mxu0 0.0
    %75 = vmatprep.subr.mxu0 0.0
    %76 = vmatpush1.msra.mxu0 0.0
    %77 = vmatprep.subr.mxu0 0.0
    %78 = vmatpush1.msra.mxu0 0.0
    %79 = vmatprep.subr.mxu0 0.0
    %80 = vmatpush1.msra.mxu0 0.0
    %81 = vmatprep.subr.mxu0 0.0
    %82 = vmatpush1.msra.mxu0 0.0
    %83 = vmatprep.subr.mxu0 0.0
    %84 = vmatpush1.msra.mxu0 0.0
    %85 = vmatprep.subr.mxu0 0.0
    %86 = vmatpush1.msra.mxu0 0.0
    %87 = vmatprep.subr.mxu0 0.0
    %88 = vmatpush1.msra.mxu0 0.0
    %89 = vmatprep.subr.mxu0 0.0
    %90 = vmatpush1.msra.mxu0 0.0
    %91 = vmatprep.subr.mxu0 0.0
    %92 = vmatpush1.msra.mxu0 0.0
    %93 = vmatprep.subr.mxu0 0.0
    %94 = vmatpush1.msra.mxu0 0.0
    %95 = vmatprep.mubr.f32.mxu0 0.0
    %96 = vmatmul.mubr.f32.gmra.mrb[0].mxu0 %v29
    %v97 = vpop.f32.mrb[0].mxu0
    %v98 = vadd.f32 %v25, %v97
    %v99 = vpop.f32.mrb[0].mxu0
    %100 = vdwg.mxu0
    %vm101 = vcmask 60416
    %102 = vst.msk [vmem:[#allocation2] sm:$0xf] %vm101, %v98
    // Predicated region
    $region14: #{_linear_forward_whole.1} parent=1 // pred_check
      _
    $region15: #{_linear_forward_whole.1} parent=1 // pred_check_branch
      %104 = sbr.rel (0) target = $region17
    $region16: #{_linear_forward_whole.1} parent=1 // pred_region
      %s106 = ssub.s32 64, 64
      %107 = vsyncadd [#allocation3], %s106
      %s109 = sshll.u32 [#allocation2], 4
      %s110 = int_to_ptr.vmem [resolvable:$true] %s109
      %112 = dma.vmem_to_hbm [thread:$0]  %s110, 64, %s3, [#allocation3]
    $region17: #{_linear_forward_whole.1} parent=1 // pred_fallthru
      _
    // Predicated region
    $region18: #{_linear_forward_whole.1} parent=1 // pred_check
      _
    $region19: #{_linear_forward_whole.1} parent=1 // pred_check_branch
      %114 = sbr.rel (0) target = $region21
    $region20: #{_linear_forward_whole.1} parent=1 // pred_region
      %115 = dma.done [#allocation3], 64
    $region21: #{_linear_forward_whole.1} parent=1 // pred_fallthru
      _
    %116 = vsyncpa [#allocation3], 1

</llo_original>
